<compile_context>
chip_gen: v7x
topology: tpu7x:2x2x1
jax: 0.10.0
libtpu: 0.0.40
codegen_flags: <defaults>
</compile_context>

<pallas_src>
import functools

import jax
import jax.numpy as jnp
from jax.experimental import pallas as pl
from jax.experimental.pallas import tpu as pltpu

EPS = 1e-5          # InstanceNorm2d default eps
LEAKY_SLOPE = 0.2   # LeakyReLU(0.2)
KSIZE = 4
STRIDE = 2


# --------------------------------------------------------------------------
# Pallas kernel: one encoder block for one batch element (grid over batch).
# --------------------------------------------------------------------------
def _block_kernel(p_ref, w_ref, b_ref, y_ref, avg_ref, *, layer, use_norm):
    p = p_ref[0]                                   # (P, K) im2col patches of the block input

    # Non-linearity on the block input (l != 0). Applied to padded patches:
    # equivalent to PyTorch (LeakyReLU(0)=Tanh(0)=0).
    if layer == 0:
        a = p
    elif layer < 3:
        a = jnp.where(p >= 0, p, LEAKY_SLOPE * p)
    else:
        a = jnp.tanh(p)

    # Conv as matmul on the MXU: (P, K) @ (K, C) + (1, C)
    y = jnp.dot(a, w_ref[...], preferred_element_type=jnp.float32) + b_ref[...]

    # InstanceNorm2d (affine=False): normalize over spatial positions (axis 0)
    # per channel, per sample (grid step == sample).
    if use_norm:
        mu = jnp.mean(y, axis=0, keepdims=True)
        var = jnp.mean(jnp.square(y - mu), axis=0, keepdims=True)
        y = (y - mu) * jax.lax.rsqrt(var + EPS)

    y_ref[0] = y                                               # (P, C)
    avg_ref[0] = jnp.mean(y, axis=0, keepdims=True)            # (1, C) == x.mean(-1).mean(-1)


def _run_block(patches, w, b, layer, use_norm):
    """patches: (N, P, K); w: (K, C); b: (1, C) -> y: (N, P, C), avg: (N, C)."""
    N, P, K = patches.shape
    C = w.shape[1]
    kern = functools.partial(_block_kernel, layer=layer, use_norm=use_norm)
    y, avg = pl.pallas_call(
        kern,
        out_shape=(
            jax.ShapeDtypeStruct((N, P, C), jnp.float32),
            jax.ShapeDtypeStruct((N, 1, C), jnp.float32),
        ),
        grid=(N,),
        in_specs=[
            pl.BlockSpec((1, P, K), lambda n: (n, 0, 0)),   # per-sample patches
            pl.BlockSpec((K, C), lambda n: (0, 0)),         # weights: VMEM-resident across grid
            pl.BlockSpec((1, C), lambda n: (0, 0)),         # bias:    VMEM-resident across grid
        ],
        out_specs=(
            pl.BlockSpec((1, P, C), lambda n: (n, 0, 0)),
            pl.BlockSpec((1, 1, C), lambda n: (n, 0, 0)),
        ),
        compiler_params=pltpu.CompilerParams(dimension_semantics=("parallel",)),
    )(patches, w, b)
    return y, avg.reshape(N, C)


# --------------------------------------------------------------------------
# Wrapper glue: im2col, NCHW bookkeeping, full 4-layer encoder.
# --------------------------------------------------------------------------
def _im2col(x, k, stride, padding):
    """x: (N, C, H, W) -> patches (N, Ho*Wo, C*k*k), feature order (c, kh, kw)."""
    N, C, H, W = x.shape
    if padding:
        x = jnp.pad(x, ((0, 0), (0, 0), (padding, padding), (padding, padding)))
    Hp, Wp = H + 2 * padding, W + 2 * padding
    Ho = (Hp - k) // stride + 1
    Wo = (Wp - k) // stride + 1
    cols = []
    for kh in range(k):
        for kw in range(k):
            cols.append(x[:, :, kh:kh + stride * Ho:stride, kw:kw + stride * Wo:stride])
    p = jnp.stack(cols, axis=2)                    # (N, C, k*k, Ho, Wo)
    p = p.reshape(N, C * k * k, Ho * Wo)           # feature order matches torch weight.reshape
    p = p.transpose(0, 2, 1)                       # (N, Ho*Wo, C*k*k)
    return p, Ho, Wo


def attention_encoder_forward(x, params, attention_flag=False, channelwise_attention=None):
    """Reproduces AttentionEncoder.forward(x) (default attention_flag=False path).

    Returns a list of (feature_map_NCHW, avg_act) tuples, one per layer.
    """
    # TODO(synk): attention_flag=True path not implemented — the reference
    # forward always passes attention_scaler=None, which would raise in the
    # original PyTorch expand_attention; only the default path is supported.
    assert not attention_flag, "attention path not supported"

    outputs = []
    for layer, lp in enumerate(params["layers"]):
        padding = 0 if layer == 3 else 1
        patches, Ho, Wo = _im2col(x, KSIZE, STRIDE, padding)
        use_norm = (layer != 0 and layer != 3)
        y, avg = _run_block(patches, lp["w"], lp["b"], layer, use_norm)
        N = x.shape[0]
        C_out = lp["w"].shape[1]
        x = y.reshape(N, Ho, Wo, C_out).transpose(0, 3, 1, 2)   # back to NCHW
        outputs.append((x, avg))
    return outputs


def init_attention_encoder_params(key, input_nc, num_downs=4, ngf=4):
    """Conv weights stored flattened+transposed: (C_in*4*4, C_out); bias (1, C_out).

    Channel plan matches the module: nc_factors = [1, 2, 4, 32], ngf = 4.
    use_bias=True (InstanceNorm-style norm_layer, i.e. not BatchNorm2d).
    """
    nc_factors = [1, 2, 4, 32]
    assert ngf == 4, "first layer channel should be fixed as 4"
    assert num_downs <= 4, "no more than 4 layers"
    chans = [input_nc]
    for l in range(num_downs):
        chans.append(ngf * nc_factors[min(len(nc_factors) - 1, l)])
    layers = []
    for l in range(num_downs):
        c_in, c_out = chans[l], chans[l + 1]
        key, kw, kb = jax.random.split(key, 3)
        fan_in = c_in * KSIZE * KSIZE
        bound = 1.0 / float(jnp.sqrt(fan_in))
        w = jax.random.uniform(kw, (fan_in, c_out), jnp.float32, -bound, bound)
        b = jax.random.uniform(kb, (1, c_out), jnp.float32, -bound, bound)
        layers.append({"w": w, "b": b})
    return {"layers": layers}


# --------------------------------------------------------------------------
# Pure-JAX reference (for correctness check only).
# --------------------------------------------------------------------------
def _ref_forward(x, params):
    outs = []
    for layer, lp in enumerate(params["layers"]):
        if layer != 0:
            x = jnp.tanh(x) if layer == 3 else jnp.where(x >= 0, x, LEAKY_SLOPE * x)
        padding = 0 if layer == 3 else 1
        C_in = x.shape[1]
        C_out = lp["w"].shape[1]
        w4 = lp["w"].T.reshape(C_out, C_in, KSIZE, KSIZE)
        y = jax.lax.conv_general_dilated(
            x, w4, window_strides=(STRIDE, STRIDE),
            padding=[(padding, padding), (padding, padding)],
            dimension_numbers=("NCHW", "OIHW", "NCHW"))
        y = y + lp["b"].reshape(1, C_out, 1, 1)
        if layer != 0 and layer != 3:
            mu = y.mean(axis=(2, 3), keepdims=True)
            var = jnp.square(y - mu).mean(axis=(2, 3), keepdims=True)
            y = (y - mu) * jax.lax.rsqrt(var + EPS)
        avg = y.mean(axis=(2, 3))
        outs.append((y, avg))
        x = y
    return outs


if __name__ == "__main__":
    # Small shapes consistent with the module ("fixed for 32*32", ngf=4):
    # batch=2, input_nc=1, 32x32 -> 16x16x4 -> 8x8x8 -> 4x4x16 -> 1x1x128.
    N, input_nc, H, W = 2, 1, 32, 32

    key = jax.random.PRNGKey(0)
    kp, kx = jax.random.split(key)
    params = init_attention_encoder_params(kp, input_nc)
    x = jax.random.normal(kx, (N, input_nc, H, W), jnp.float32)

    outs = attention_encoder_forward(x, params)
    outs = jax.block_until_ready(outs)

    refs = _ref_forward(x, params)
    expected_shapes = [(N, 4, 16, 16), (N, 8, 8, 8), (N, 16, 4, 4), (N, 128, 1, 1)]
    for l, ((y, a), (yr, ar), es) in enumerate(zip(outs, refs, expected_shapes)):
        assert y.shape == es, (l, y.shape, es)
        assert a.shape == (N, es[1]), (l, a.shape)
        assert jnp.allclose(y, yr, atol=1e-4, rtol=1e-4), f"feature mismatch at layer {l}"
        assert jnp.allclose(a, ar, atol=1e-4, rtol=1e-4), f"avg_act mismatch at layer {l}"

    print("KERNEL_OK")
</pallas_src>

<mosaic_0001>
module attributes {stable_mosaic.version = 11 : i64} {
  func.func @_block_kernel(%arg0: i32, %arg1: memref<1x256x16xf32, #tpu.memory_space<vmem>>, %arg2: memref<16x4xf32, #tpu.memory_space<vmem>>, %arg3: memref<1x4xf32, #tpu.memory_space<vmem>>, %arg4: memref<1x256x4xf32, #tpu.memory_space<vmem>>, %arg5: memref<1x1x4xf32, #tpu.memory_space<vmem>>) attributes {dimension_semantics = [#tpu.dimension_semantics<parallel>], iteration_bounds = array<i64: 2>, scalar_prefetch = 0 : i64, scratch_operands = 0 : i64, tpu.core_type = #tpu.core_type<tc>, window_params = [{transform_indices = @transform_0, window_bounds = array<i64: 1, 256, 16>}, {pipeline_mode = #tpu.pipeline_mode<synchronous>, transform_indices = @transform_1, window_bounds = array<i64: 16, 4>}, {pipeline_mode = #tpu.pipeline_mode<synchronous>, transform_indices = @transform_2, window_bounds = array<i64: 1, 4>}, {transform_indices = @transform_3, window_bounds = array<i64: 1, 256, 4>}, {transform_indices = @transform_4, window_bounds = array<i64: 1, 1, 4>}]} {
    %c0 = arith.constant 0 : index
    %c0_0 = arith.constant 0 : index
    %c0_1 = arith.constant 0 : index
    %0 = vector.load %arg1[%c0, %c0_0, %c0_1] : memref<1x256x16xf32, #tpu.memory_space<vmem>>, vector<1x256x16xf32>
    %1 = vector.shape_cast %0 : vector<1x256x16xf32> to vector<256x16xf32>
    %c0_2 = arith.constant 0 : index
    %c0_3 = arith.constant 0 : index
    %2 = vector.load %arg2[%c0_2, %c0_3] : memref<16x4xf32, #tpu.memory_space<vmem>>, vector<16x4xf32>
    %cst = arith.constant dense<0.000000e+00> : vector<256x4xf32>
    %3 = tpu.matmul %1, %2, %cst {dimension_numbers = #tpu.dot_dimension_numbers<[1], [0], [0], [1], [0, 0, 1, 1], [], []>} : vector<256x16xf32>, vector<16x4xf32>, vector<256x4xf32> -> vector<256x4xf32>
    %c0_4 = arith.constant 0 : index
    %c0_5 = arith.constant 0 : index
    %4 = vector.load %arg3[%c0_4, %c0_5] : memref<1x4xf32, #tpu.memory_space<vmem>>, vector<1x4xf32>
    %5 = vector.broadcast %4 : vector<1x4xf32> to vector<256x4xf32>
    %6 = arith.addf %3, %5 : vector<256x4xf32>
    %c0_6 = arith.constant 0 : index
    %c0_7 = arith.constant 0 : index
    %c0_8 = arith.constant 0 : index
    %7 = vector.load %arg4[%c0_6, %c0_7, %c0_8] : memref<1x256x4xf32, #tpu.memory_space<vmem>>, vector<1x256x4xf32>
    %8 = vector.shape_cast %7 : vector<1x256x4xf32> to vector<256x4xf32>
    %9 = vector.shape_cast %6 : vector<256x4xf32> to vector<1x256x4xf32>
    tpu.vector_store %arg4[%c0_6, %c0_7, %c0_8], %9 {strides = array<i32>} : memref<1x256x4xf32, #tpu.memory_space<vmem>>, vector<1x256x4xf32>,
    %cst_9 = arith.constant dense<0.000000e+00> : vector<4xf32>
    %10 = vector.multi_reduction <add>, %6, %cst_9 [0] : vector<256x4xf32> to vector<4xf32>
    %11 = vector.shape_cast %10 : vector<4xf32> to vector<1x4xf32>
    %cst_10 = arith.constant 2.560000e+02 : f32
    %12 = vector.broadcast %cst_10 : f32 to vector<1x4xf32>
    %13 = arith.divf %11, %12 : vector<1x4xf32>
    %c0_11 = arith.constant 0 : index
    %c0_12 = arith.constant 0 : index
    %c0_13 = arith.constant 0 : index
    %14 = vector.load %arg5[%c0_11, %c0_12, %c0_13] : memref<1x1x4xf32, #tpu.memory_space<vmem>>, vector<1x1x4xf32>
    %15 = vector.shape_cast %14 : vector<1x1x4xf32> to vector<1x4xf32>
    %16 = vector.shape_cast %13 : vector<1x4xf32> to vector<1x1x4xf32>
    tpu.vector_store %arg5[%c0_11, %c0_12, %c0_13], %16 {strides = array<i32>} : memref<1x1x4xf32, #tpu.memory_space<vmem>>, vector<1x1x4xf32>,
    return
  }
  func.func @transform_0(%arg0: i32) -> (i32, i32, i32) {
    %c0_i32 = arith.constant 0 : i32
    %c0_i32_0 = arith.constant 0 : i32
    %c0_i32_1 = arith.constant 0 : i32
    return %arg0, %c0_i32, %c0_i32_0 : i32, i32, i32
  }
  func.func @transform_1(%arg0: i32) -> (i32, i32) {
    %c0_i32 = arith.constant 0 : i32
    %c0_i32_0 = arith.constant 0 : i32
    %c0_i32_1 = arith.constant 0 : i32
    return %c0_i32, %c0_i32_0 : i32, i32
  }
  func.func @transform_2(%arg0: i32) -> (i32, i32) {
    %c0_i32 = arith.constant 0 : i32
    %c0_i32_0 = arith.constant 0 : i32
    %c0_i32_1 = arith.constant 0 : i32
    return %c0_i32, %c0_i32_0 : i32, i32
  }
  func.func @transform_3(%arg0: i32) -> (i32, i32, i32) {
    %c0_i32 = arith.constant 0 : i32
    %c0_i32_0 = arith.constant 0 : i32
    %c0_i32_1 = arith.constant 0 : i32
    return %arg0, %c0_i32, %c0_i32_0 : i32, i32, i32
  }
  func.func @transform_4(%arg0: i32) -> (i32, i32, i32) {
    %c0_i32 = arith.constant 0 : i32
    %c0_i32_0 = arith.constant 0 : i32
    %c0_i32_1 = arith.constant 0 : i32
    return %arg0, %c0_i32, %c0_i32_0 : i32, i32, i32
  }
}

</mosaic_0001>

<llo_original>
// kernel: tpu_custom_call.1
$region0: #{tpu_custom_call.1}
  #allocation0 [shape = 'u32[]', space=smem, size = 0x4, offset = 0x4, fixed_abs, tag = 'smem constant byte address 0x4 - core index']
  #allocation1 [shape = 'u32[144,128]{1,0:T(1,128)}', space=vmem, size = 0x12000, scoped, tag = 'internal scratch']
  %s0 = inlined_call_operand.vmem [shape: f32[2,256,16], index: 0, kind: input, shape index: {}]
  %s1 = inlined_call_operand.vmem [shape: f32[16,4], index: 1, kind: input, shape index: {}]
  %s2 = inlined_call_operand.vmem [shape: f32[1,4], index: 2, kind: input, shape index: {}]
  %s3 = inlined_call_operand.vmem [shape: f32[2,256,4], index: 3, kind: output, shape index: {0}]
  %s4 = inlined_call_operand.hbm [shape: f32[2,1,4], index: 4, kind: output, shape index: {1}]
  %5 = xla_tuple %s3, %s4
  %s6 = sld [smem:[#allocation0]]
  $region53: #{tpu_custom_call.1} parent=0
    _
  %s8 = ssub.s32 1, %s6
  %s9 = scalar_select 0, %s8, %s6
  $region1: #{tpu_custom_call.1} parent=0
    #allocation2 [shape = 'u8[1024]{0}', space=vmem, size = 0x400, scoped, tag = 'output window, operand 1']
    #allocation3 [shape = 's32[2]{0}', space=sflag, size = 0x8, scoped, tag = 'scoped memory for tpu_custom_call.1']
    %10 = vsyncpa [#allocation3], 0
    %s11 = scalar_lea.sflag [#allocation3], 1
    %12 = vsyncpa %s11, 0
    loop: start=0, step=1, limit=4
    $region2: #{tpu_custom_call.1} parent=1 // loop_pre_header
      _
    $region3: #{tpu_custom_call.1} parent=1 // loop_header
      %s14 = sphi 0, %s18
      %p15 = scmp.ge.s32.totalorder %s14, 4
      %s24 = sphi 0, %s26
      %s27 = sphi 0, %s24
      %s28 = sphi 0, %s27
      %s44 = sphi 0, %s28
      %s48 = sphi 0, %s48
      %s50 = sphi 0, %s48
      %s51 = sphi 0, %s50
      %s65 = sphi 0, %s51
      %s69 = sphi 0, %s69
      %s71 = sphi 0, %s69
      %s72 = sphi 0, %s71
      %s86 = sphi 0, %s72
      %s92 = sphi 0, %s94
      %s95 = sphi 0, %s92
      %s96 = sphi 0, %s95
      %s112 = sphi 0, %s96
      %s118 = sphi 0, %s120
      %s121 = sphi 0, %s118
      %s122 = sphi 0, %s121
      %s138 = sphi 0, %s122
    $region4: #{tpu_custom_call.1} parent=1 // loop_header_branch
      %17 = sbr.rel (%p15) target = $region8
    $region5: #{tpu_custom_call.1} parent=1 // loop_body
      %s19 = ssub.s32 %s14, 1
      %s20 = ssub.s32 %s14, 2
      %s21 = sadd.s32 %s14, 1
      %s22 = ssub.s32 %s14, %s21
      %p23 = scmp.eq.s32.totalorder %s22, 0
      %s25 = sadd.s32 %s24, 1
      %s26 = scalar_select %p23, %s24, %s25
      %p29 = pneg %p23
      %p30 = scmp.eq.s32.totalorder %s14, 1
      %p31 = por %p29, %p30
      %p32 = scmp.ne.s32.totalorder %s24, %s27
      %p33 = scmp.eq.s32.totalorder %s14, 0
      %p34 = por %p32, %p33
      %p35 = scmp.ne.s32.totalorder %s24, %s27
      %p36 = scmp.eq.s32.totalorder %s19, 1
      %p37 = por %p35, %p36
      %p38 = scmp.ne.s32.totalorder %s27, %s28
      %p39 = scmp.eq.s32.totalorder %s19, 0
      %p40 = por %p38, %p39
      %p41 = scmp.ne.s32.totalorder %s27, %s28
      %p42 = scmp.eq.s32.totalorder %s20, 1
      %p43 = por %p41, %p42
      %p45 = scmp.ne.s32.totalorder %s28, %s44
      %p46 = scmp.eq.s32.totalorder %s20, 0
      %p47 = por %p45, %p46
      %s49 = sadd.s32 %s48, 1
      %p52 = scmp.eq.s32.totalorder %s14, 1
      %p53 = scmp.ne.s32.totalorder %s48, %s50
      %p54 = scmp.eq.s32.totalorder %s14, 0
      %p55 = por %p53, %p54
      %p56 = scmp.ne.s32.totalorder %s48, %s50
      %p57 = scmp.eq.s32.totalorder %s19, 1
      %p58 = por %p56, %p57
      %p59 = scmp.ne.s32.totalorder %s50, %s51
      %p60 = scmp.eq.s32.totalorder %s19, 0
      %p61 = por %p59, %p60
      %p62 = scmp.ne.s32.totalorder %s50, %s51
      %p63 = scmp.eq.s32.totalorder %s20, 1
      %p64 = por %p62, %p63
      %p66 = scmp.ne.s32.totalorder %s51, %s65
      %p67 = scmp.eq.s32.totalorder %s20, 0
      %p68 = por %p66, %p67
      %s70 = sadd.s32 %s69, 1
      %p73 = scmp.eq.s32.totalorder %s14, 1
      %p74 = scmp.ne.s32.totalorder %s69, %s71
      %p75 = scmp.eq.s32.totalorder %s14, 0
      %p76 = por %p74, %p75
      %p77 = scmp.ne.s32.totalorder %s69, %s71
      %p78 = scmp.eq.s32.totalorder %s19, 1
      %p79 = por %p77, %p78
      %p80 = scmp.ne.s32.totalorder %s71, %s72
      %p81 = scmp.eq.s32.totalorder %s19, 0
      %p82 = por %p80, %p81
      %p83 = scmp.ne.s32.totalorder %s71, %s72
      %p84 = scmp.eq.s32.totalorder %s20, 1
      %p85 = por %p83, %p84
      %p87 = scmp.ne.s32.totalorder %s72, %s86
      %p88 = scmp.eq.s32.totalorder %s20, 0
      %p89 = por %p87, %p88
      %s90 = ssub.s32 %s14, %s21
      %p91 = scmp.eq.s32.totalorder %s90, 0
      %s93 = sadd.s32 %s92, 1
      %s94 = scalar_select %p91, %s92, %s93
      %p97 = pneg %p91
      %p98 = scmp.eq.s32.totalorder %s14, 1
      %p99 = por %p97, %p98
      %p100 = scmp.ne.s32.totalorder %s92, %s95
      %p101 = scmp.eq.s32.totalorder %s14, 0
      %p102 = por %p100, %p101
      %p103 = scmp.ne.s32.totalorder %s92, %s95
      %p104 = scmp.eq.s32.totalorder %s19, 1
      %p105 = por %p103, %p104
      %p106 = scmp.ne.s32.totalorder %s95, %s96
      %p107 = scmp.eq.s32.totalorder %s19, 0
      %p108 = por %p106, %p107
      %p109 = scmp.ne.s32.totalorder %s95, %s96
      %p110 = scmp.eq.s32.totalorder %s20, 1
      %p111 = por %p109, %p110
      %p113 = scmp.ne.s32.totalorder %s96, %s112
      %p114 = scmp.eq.s32.totalorder %s20, 0
      %p115 = por %p113, %p114
      %s116 = ssub.s32 %s14, %s21
      %p117 = scmp.eq.s32.totalorder %s116, 0
      %s119 = sadd.s32 %s118, 1
      %s120 = scalar_select %p117, %s118, %s119
      %p123 = pneg %p117
      %p124 = scmp.eq.s32.totalorder %s14, 1
      %p125 = por %p123, %p124
      %p126 = scmp.ne.s32.totalorder %s118, %s121
      %p127 = scmp.eq.s32.totalorder %s14, 0
      %p128 = por %p126, %p127
      %p129 = scmp.ne.s32.totalorder %s118, %s121
      %p130 = scmp.eq.s32.totalorder %s19, 1
      %p131 = por %p129, %p130
      %p132 = scmp.ne.s32.totalorder %s121, %s122
      %p133 = scmp.eq.s32.totalorder %s19, 0
      %p134 = por %p132, %p133
      %p135 = scmp.ne.s32.totalorder %s121, %s122
      %p136 = scmp.eq.s32.totalorder %s20, 1
      %p137 = por %p135, %p136
      %p139 = scmp.ne.s32.totalorder %s122, %s138
      %p140 = scmp.eq.s32.totalorder %s20, 0
      %p141 = por %p139, %p140
      %p142 = scmp.le.s32.totalorder 1, %s14
      %p143 = scmp.lt.s32.totalorder %s14, 3
      %p144 = pnand %p142, %p143
      %p145 = pneg %p144
      // Predicated region
      $region9: #{tpu_custom_call.1} parent=5 // pred_check
        _
      $region10: #{tpu_custom_call.1} parent=5 // pred_check_branch
        %147 = sbr.rel (%p144) target = $region12
      $region11: #{tpu_custom_call.1} parent=5 // pred_region
        %s148 = ssub.s32 %s14, 1
        // Predicated region
        $region13: #{tpu_custom_call.1} parent=11 // pred_check
          %p149 = pneg %p61
        $region14: #{tpu_custom_call.1} parent=11 // pred_check_branch
          %151 = sbr.rel (%p149) target = $region16
        $region15: #{tpu_custom_call.1} parent=11 // pred_region
          _
        $region16: #{tpu_custom_call.1} parent=11 // pred_fallthru
          _
        // Predicated region
        $region17: #{tpu_custom_call.1} parent=11 // pred_check
          %p152 = pneg %p82
        $region18: #{tpu_custom_call.1} parent=11 // pred_check_branch
          %154 = sbr.rel (%p152) target = $region20
        $region19: #{tpu_custom_call.1} parent=11 // pred_region
          _
        $region20: #{tpu_custom_call.1} parent=11 // pred_fallthru
          _
      $region12: #{tpu_custom_call.1} parent=5 // pred_fallthru
        _
      %p155 = scmp.lt.s32.totalorder %s14, 2
      // Predicated region
      $region21: #{tpu_custom_call.1} parent=5 // pred_check
        %p156 = pneg %p155
      $region22: #{tpu_custom_call.1} parent=5 // pred_check_branch
        %158 = sbr.rel (%p156) target = $region24
      $region23: #{tpu_custom_call.1} parent=5 // pred_region
        // Predicated region
        $region25: #{tpu_custom_call.1} parent=23 // pred_check
          %p159 = pneg %p34
        $region26: #{tpu_custom_call.1} parent=23 // pred_check_branch
          %161 = sbr.rel (%p159) target = $region28
        $region27: #{tpu_custom_call.1} parent=23 // pred_region
          %p162 = scmp.lt.s32.totalorder %s14, 1
          %s163 = scalar_select %p162, %s14, 1
          %s164 = smul.addr %s163, 32
          %s165 = smul.addr %s164, 8
          %s166 = scalar_lea.vmem %s0, %s165
        $region28: #{tpu_custom_call.1} parent=23 // pred_fallthru
          _
      $region24: #{tpu_custom_call.1} parent=5 // pred_fallthru
        _
      %p167 = scmp.le.s32.totalorder 1, %s14
      %p168 = scmp.lt.s32.totalorder %s14, 3
      %p169 = pnand %p167, %p168
      %p170 = pneg %p169
      // Predicated region
      $region29: #{tpu_custom_call.1} parent=5 // pred_check
        _
      $region30: #{tpu_custom_call.1} parent=5 // pred_check_branch
        %172 = sbr.rel (%p169) target = $region32
      $region31: #{tpu_custom_call.1} parent=5 // pred_region
        %s173 = ssub.s32 %s14, 1
        %p174 = scmp.lt.s32.totalorder %s19, 1
        %s175 = scalar_select %p174, %s19, 1
        %s176 = smul.addr %s175, 32
        %s177 = smul.addr %s176, 8
        %s178 = scalar_lea.vmem %s0, %s177
        %p179 = pneg %p40
        %p180 = pneg %p37
        %p181 = pneg %p61
        %p182 = pneg %p58
        %p183 = pneg %p82
        %p184 = pneg %p79
        %p185 = pneg %p108
        %p186 = pneg %p105
        %p187 = scmp.lt.s32.totalorder %s19, 1
        %s188 = scalar_select %p187, %s19, 1
        %s189 = smul.addr %s188, 32
        %s190 = smul.addr %s189, 8
        %s191 = scalar_lea.vmem %s3, %s190
        %p192 = pneg %p134
        %p193 = pneg %p131
        %s194 = sand.u32 %s121, 1
        %s195 = scalar_lea.sflag [#allocation3], %s194
        %s196 = sand.u32 %s121, 1
        %s197 = scalar_lea.vmem [#allocation2], %s196
        %p198 = scmp.lt.s32.totalorder %s19, 1
        %s199 = scalar_select %p198, %s19, 1
        %s200 = smul.addr %s199, 32
        %s201 = smul.addr %s200, 8
        %s202 = scalar_lea.vmem %s0, %s201
        %p203 = scmp.lt.s32.totalorder %s19, 1
        %s204 = scalar_select %p203, %s19, 1
        %s205 = smul.addr %s204, 32
        %s206 = smul.addr %s205, 8
        %s207 = scalar_lea.vmem %s3, %s206
        %v208 = vld [vmem:[%s202] sm:$0xff]
        %v209 = vld [vmem:[%s202 + $0x8] sm:$0xff]
        %v210 = vld [vmem:[%s202 + $0x10] sm:$0xff]
        %v211 = vld [vmem:[%s202 + $0x18] sm:$0xff]
        %v212 = vld [vmem:[%s202 + $0x20] sm:$0xff]
        %v213 = vld [vmem:[%s202 + $0x28] sm:$0xff]
        %v214 = vld [vmem:[%s202 + $0x30] sm:$0xff]
        %v215 = vld [vmem:[%s202 + $0x38] sm:$0xff]
        %v216 = vld [vmem:[%s202 + $0x40] sm:$0xff]
        %v217 = vld [vmem:[%s202 + $0x48] sm:$0xff]
        %v218 = vld [vmem:[%s202 + $0x50] sm:$0xff]
        %v219 = vld [vmem:[%s202 + $0x58] sm:$0xff]
        %v220 = vld [vmem:[%s202 + $0x60] sm:$0xff]
        %v221 = vld [vmem:[%s202 + $0x68] sm:$0xff]
        %v222 = vld [vmem:[%s202 + $0x70] sm:$0xff]
        %v223 = vld [vmem:[%s202 + $0x78] sm:$0xff]
        %v224 = vld [vmem:[%s202 + $0x80] sm:$0xff]
        %v225 = vld [vmem:[%s202 + $0x88] sm:$0xff]
        %v226 = vld [vmem:[%s202 + $0x90] sm:$0xff]
        %v227 = vld [vmem:[%s202 + $0x98] sm:$0xff]
        %v228 = vld [vmem:[%s202 + $0xa0] sm:$0xff]
        %v229 = vld [vmem:[%s202 + $0xa8] sm:$0xff]
        %v230 = vld [vmem:[%s202 + $0xb0] sm:$0xff]
        %v231 = vld [vmem:[%s202 + $0xb8] sm:$0xff]
        %v232 = vld [vmem:[%s202 + $0xc0] sm:$0xff]
        %v233 = vld [vmem:[%s202 + $0xc8] sm:$0xff]
        %v234 = vld [vmem:[%s202 + $0xd0] sm:$0xff]
        %v235 = vld [vmem:[%s202 + $0xd8] sm:$0xff]
        %v236 = vld [vmem:[%s202 + $0xe0] sm:$0xff]
        %v237 = vld [vmem:[%s202 + $0xe8] sm:$0xff]
        %v238 = vld [vmem:[%s202 + $0xf0] sm:$0xff]
        %v239 = vld [vmem:[%s202 + $0xf8] sm:$0xff]
        %v240 = vld [vmem:[%s1] sm:$0xff]
        %v241 = vld [vmem:[%s1 + $0x8] sm:$0xff]
        %v242 = vld [vmem:[%s2] sm:$0x1]
        %v244 = vlaneseq
        %v245 = vshrl.u32 %v244, 7
        %v246 = vsub.s32 0, %v245
        %v247 = vrot.slane %v242, %v246
        %vm249 = vcmask 130048
        %v251 = vsel %vm249, %v208, 0
        %v254 = vsel %vm249, %v209, 0
        %v257 = vsel %vm249, %v210, 0
        %v260 = vsel %vm249, %v211, 0
        %v263 = vsel %vm249, %v212, 0
        %v266 = vsel %vm249, %v213, 0
        %v269 = vsel %vm249, %v214, 0
        %v272 = vsel %vm249, %v215, 0
        %v275 = vsel %vm249, %v216, 0
        %v278 = vsel %vm249, %v217, 0
        %v281 = vsel %vm249, %v218, 0
        %v284 = vsel %vm249, %v219, 0
        %v287 = vsel %vm249, %v220, 0
        %v290 = vsel %vm249, %v221, 0
        %v293 = vsel %vm249, %v222, 0
        %v296 = vsel %vm249, %v223, 0
        %v299 = vsel %vm249, %v224, 0
        %v302 = vsel %vm249, %v225, 0
        %v305 = vsel %vm249, %v226, 0
        %v308 = vsel %vm249, %v227, 0
        %v311 = vsel %vm249, %v228, 0
        %v314 = vsel %vm249, %v229, 0
        %v317 = vsel %vm249, %v230, 0
        %v320 = vsel %vm249, %v231, 0
        %v323 = vsel %vm249, %v232, 0
        %v326 = vsel %vm249, %v233, 0
        %v329 = vsel %vm249, %v234, 0
        %v332 = vsel %vm249, %v235, 0
        %v335 = vsel %vm249, %v236, 0
        %v338 = vsel %vm249, %v237, 0
        %v341 = vsel %vm249, %v238, 0
        %v344 = vsel %vm249, %v239, 0
        %346 = vmatprep.subr.mxu0 0.0
        %347 = vmatpush1.msra.mxu0 %v240
        %348 = vmatprep.subr.mxu0 0.0
        %349 = vmatpush1.msra.mxu0 %v241
        %350 = vmatprep.subr.mxu0 0.0
        %351 = vmatpush1.msra.mxu0 0.0
        %352 = vmatprep.subr.mxu0 0.0
        %353 = vmatpush1.msra.mxu0 0.0
        %354 = vmatprep.subr.mxu0 0.0
        %355 = vmatpush1.msra.mxu0 0.0
        %356 = vmatprep.subr.mxu0 0.0
        %357 = vmatpush1.msra.mxu0 0.0
        %358 = vmatprep.subr.mxu0 0.0
        %359 = vmatpush1.msra.mxu0 0.0
        %360 = vmatprep.subr.mxu0 0.0
        %361 = vmatpush1.msra.mxu0 0.0
        %362 = vmatprep.subr.mxu0 0.0
        %363 = vmatpush1.msra.mxu0 0.0
        %364 = vmatprep.subr.mxu0 0.0
        %365 = vmatpush1.msra.mxu0 0.0
        %366 = vmatprep.subr.mxu0 0.0
        %367 = vmatpush1.msra.mxu0 0.0
        %368 = vmatprep.subr.mxu0 0.0
        %369 = vmatpush1.msra.mxu0 0.0
        %370 = vmatprep.subr.mxu0 0.0
        %371 = vmatpush1.msra.mxu0 0.0
        %372 = vmatprep.subr.mxu0 0.0
        %373 = vmatpush1.msra.mxu0 0.0
        %374 = vmatprep.subr.mxu0 0.0
        %375 = vmatpush1.msra.mxu0 0.0
        %376 = vmatprep.subr.mxu0 0.0
        %377 = vmatpush1.msra.mxu0 0.0
        %378 = vmatprep.subr.mxu0 0.0
        %379 = vmatpush1.msra.mxu0 0.0
        %380 = vmatprep.subr.mxu0 0.0
        %381 = vmatpush1.msra.mxu0 0.0
        %382 = vmatprep.subr.mxu0 0.0
        %383 = vmatpush1.msra.mxu0 0.0
        %384 = vmatprep.subr.mxu0 0.0
        %385 = vmatpush1.msra.mxu0 0.0
        %386 = vmatprep.subr.mxu0 0.0
        %387 = vmatpush1.msra.mxu0 0.0
        %388 = vmatprep.subr.mxu0 0.0
        %389 = vmatpush1.msra.mxu0 0.0
        %390 = vmatprep.subr.mxu0 0.0
        %391 = vmatpush1.msra.mxu0 0.0
        %392 = vmatprep.subr.mxu0 0.0
        %393 = vmatpush1.msra.mxu0 0.0
        %394 = vmatprep.subr.mxu0 0.0
        %395 = vmatpush1.msra.mxu0 0.0
        %396 = vmatprep.subr.mxu0 0.0
        %397 = vmatpush1.msra.mxu0 0.0
        %398 = vmatprep.subr.mxu0 0.0
        %399 = vmatpush1.msra.mxu0 0.0
        %400 = vmatprep.subr.mxu0 0.0
        %401 = vmatpush1.msra.mxu0 0.0
        %402 = vmatprep.subr.mxu0 0.0
        %403 = vmatpush1.msra.mxu0 0.0
        %404 = vmatprep.subr.mxu0 0.0
        %405 = vmatpush1.msra.mxu0 0.0
        %406 = vmatprep.subr.mxu0 0.0
        %407 = vmatpush1.msra.mxu0 0.0
        %408 = vmatprep.subr.mxu0 0.0
        %409 = vmatpush1.msra.mxu0 0.0
        %410 = vmatprep.mubr.f32.mxu0 0.0
        %411 = vmatmul.mubr.f32.gmra.mrb[0].mxu0 %v251
        %v412 = vpop.f32.mrb[0].mxu0
        %v413 = vadd.f32 %v247, %v412
        %v414 = vpop.f32.mrb[0].mxu0
        %415 = vmatprep.mubr.f32.mxu0 0.0
        %416 = vmatmul.mubr.f32.gmra.mrb[0].mxu0 %v254
        %v417 = vpop.f32.mrb[0].mxu0
        %v418 = vadd.f32 %v247, %v417
        %v419 = vpop.f32.mrb[0].mxu0
        %420 = vmatprep.mubr.f32.mxu0 0.0
        %421 = vmatmul.mubr.f32.gmra.mrb[0].mxu0 %v257
        %v422 = vpop.f32.mrb[0].mxu0
        %v423 = vadd.f32 %v247, %v422
        %v424 = vpop.f32.mrb[0].mxu0
        %425 = vmatprep.mubr.f32.mxu0 0.0
        %426 = vmatmul.mubr.f32.gmra.mrb[0].mxu0 %v260
        %v427 = vpop.f32.mrb[0].mxu0
        %v428 = vadd.f32 %v247, %v427
        %v429 = vpop.f32.mrb[0].mxu0
        %430 = vmatprep.mubr.f32.mxu0 0.0
        %431 = vmatmul.mubr.f32.gmra.mrb[0].mxu0 %v263
        %v432 = vpop.f32.mrb[0].mxu0
        %v433 = vadd.f32 %v247, %v432
        %v434 = vpop.f32.mrb[0].mxu0
        %435 = vmatprep.mubr.f32.mxu0 0.0
        %436 = vmatmul.mubr.f32.gmra.mrb[0].mxu0 %v266
        %v437 = vpop.f32.mrb[0].mxu0
        %v438 = vadd.f32 %v247, %v437
        %v439 = vpop.f32.mrb[0].mxu0
        %440 = vmatprep.mubr.f32.mxu0 0.0
        %441 = vmatmul.mubr.f32.gmra.mrb[0].mxu0 %v269
        %v442 = vpop.f32.mrb[0].mxu0
        %v443 = vadd.f32 %v247, %v442
        %v444 = vpop.f32.mrb[0].mxu0
        %445 = vmatprep.mubr.f32.mxu0 0.0
        %446 = vmatmul.mubr.f32.gmra.mrb[0].mxu0 %v272
        %v447 = vpop.f32.mrb[0].mxu0
        %v448 = vadd.f32 %v247, %v447
        %v449 = vpop.f32.mrb[0].mxu0
        %450 = vmatprep.mubr.f32.mxu0 0.0
        %451 = vmatmul.mubr.f32.gmra.mrb[0].mxu0 %v275
        %v452 = vpop.f32.mrb[0].mxu0
        %v453 = vadd.f32 %v247, %v452
        %v454 = vpop.f32.mrb[0].mxu0
        %455 = vmatprep.mubr.f32.mxu0 0.0
        %456 = vmatmul.mubr.f32.gmra.mrb[0].mxu0 %v278
        %v457 = vpop.f32.mrb[0].mxu0
        %v458 = vadd.f32 %v247, %v457
        %v459 = vpop.f32.mrb[0].mxu0
        %460 = vmatprep.mubr.f32.mxu0 0.0
        %461 = vmatmul.mubr.f32.gmra.mrb[0].mxu0 %v281
        %v462 = vpop.f32.mrb[0].mxu0
        %v463 = vadd.f32 %v247, %v462
        %v464 = vpop.f32.mrb[0].mxu0
        %465 = vmatprep.mubr.f32.mxu0 0.0
        %466 = vmatmul.mubr.f32.gmra.mrb[0].mxu0 %v284
        %v467 = vpop.f32.mrb[0].mxu0
        %v468 = vadd.f32 %v247, %v467
        %v469 = vpop.f32.mrb[0].mxu0
        %470 = vmatprep.mubr.f32.mxu0 0.0
        %471 = vmatmul.mubr.f32.gmra.mrb[0].mxu0 %v287
        %v472 = vpop.f32.mrb[0].mxu0
        %v473 = vadd.f32 %v247, %v472
        %v474 = vpop.f32.mrb[0].mxu0
        %475 = vmatprep.mubr.f32.mxu0 0.0
        %476 = vmatmul.mubr.f32.gmra.mrb[0].mxu0 %v290
        %v477 = vpop.f32.mrb[0].mxu0
        %v478 = vadd.f32 %v247, %v477
        %v479 = vpop.f32.mrb[0].mxu0
        %480 = vmatprep.mubr.f32.mxu0 0.0
        %481 = vmatmul.mubr.f32.gmra.mrb[0].mxu0 %v293
        %v482 = vpop.f32.mrb[0].mxu0
        %v483 = vadd.f32 %v247, %v482
        %v484 = vpop.f32.mrb[0].mxu0
        %485 = vmatprep.mubr.f32.mxu0 0.0
        %486 = vmatmul.mubr.f32.gmra.mrb[0].mxu0 %v296
        %v487 = vpop.f32.mrb[0].mxu0
        %v488 = vadd.f32 %v247, %v487
        %v489 = vpop.f32.mrb[0].mxu0
        %490 = vmatprep.mubr.f32.mxu0 0.0
        %491 = vmatmul.mubr.f32.gmra.mrb[0].mxu0 %v299
        %v492 = vpop.f32.mrb[0].mxu0
        %v493 = vadd.f32 %v247, %v492
        %v494 = vpop.f32.mrb[0].mxu0
        %495 = vmatprep.mubr.f32.mxu0 0.0
        %496 = vmatmul.mubr.f32.gmra.mrb[0].mxu0 %v302
        %v497 = vpop.f32.mrb[0].mxu0
        %v498 = vadd.f32 %v247, %v497
        %v499 = vpop.f32.mrb[0].mxu0
        %500 = vmatprep.mubr.f32.mxu0 0.0
        %501 = vmatmul.mubr.f32.gmra.mrb[0].mxu0 %v305
        %v502 = vpop.f32.mrb[0].mxu0
        %v503 = vadd.f32 %v247, %v502
        %v504 = vpop.f32.mrb[0].mxu0
        %505 = vmatprep.mubr.f32.mxu0 0.0
        %506 = vmatmul.mubr.f32.gmra.mrb[0].mxu0 %v308
        %v507 = vpop.f32.mrb[0].mxu0
        %v508 = vadd.f32 %v247, %v507
        %v509 = vpop.f32.mrb[0].mxu0
        %510 = vmatprep.mubr.f32.mxu0 0.0
        %511 = vmatmul.mubr.f32.gmra.mrb[0].mxu0 %v311
        %v512 = vpop.f32.mrb[0].mxu0
        %v513 = vadd.f32 %v247, %v512
        %v514 = vpop.f32.mrb[0].mxu0
        %515 = vmatprep.mubr.f32.mxu0 0.0
        %516 = vmatmul.mubr.f32.gmra.mrb[0].mxu0 %v314
        %v517 = vpop.f32.mrb[0].mxu0
        %v518 = vadd.f32 %v247, %v517
        %v519 = vpop.f32.mrb[0].mxu0
        %520 = vmatprep.mubr.f32.mxu0 0.0
        %521 = vmatmul.mubr.f32.gmra.mrb[0].mxu0 %v317
        %v522 = vpop.f32.mrb[0].mxu0
        %v523 = vadd.f32 %v247, %v522
        %v524 = vpop.f32.mrb[0].mxu0
        %525 = vmatprep.mubr.f32.mxu0 0.0
        %526 = vmatmul.mubr.f32.gmra.mrb[0].mxu0 %v320
        %v527 = vpop.f32.mrb[0].mxu0
        %v528 = vadd.f32 %v247, %v527
        %v529 = vpop.f32.mrb[0].mxu0
        %530 = vmatprep.mubr.f32.mxu0 0.0
        %531 = vmatmul.mubr.f32.gmra.mrb[0].mxu0 %v323
        %v532 = vpop.f32.mrb[0].mxu0
        %v533 = vadd.f32 %v247, %v532
        %v534 = vpop.f32.mrb[0].mxu0
        %535 = vmatprep.mubr.f32.mxu0 0.0
        %536 = vmatmul.mubr.f32.gmra.mrb[0].mxu0 %v326
        %v537 = vpop.f32.mrb[0].mxu0
        %v538 = vadd.f32 %v247, %v537
        %v539 = vpop.f32.mrb[0].mxu0
        %540 = vmatprep.mubr.f32.mxu0 0.0
        %541 = vmatmul.mubr.f32.gmra.mrb[0].mxu0 %v329
        %v542 = vpop.f32.mrb[0].mxu0
        %v543 = vadd.f32 %v247, %v542
        %v544 = vpop.f32.mrb[0].mxu0
        %545 = vmatprep.mubr.f32.mxu0 0.0
        %546 = vmatmul.mubr.f32.gmra.mrb[0].mxu0 %v332
        %v547 = vpop.f32.mrb[0].mxu0
        %v548 = vadd.f32 %v247, %v547
        %v549 = vpop.f32.mrb[0].mxu0
        %550 = vmatprep.mubr.f32.mxu0 0.0
        %551 = vmatmul.mubr.f32.gmra.mrb[0].mxu0 %v335
        %v552 = vpop.f32.mrb[0].mxu0
        %v553 = vadd.f32 %v247, %v552
        %v554 = vpop.f32.mrb[0].mxu0
        %555 = vmatprep.mubr.f32.mxu0 0.0
        %556 = vmatmul.mubr.f32.gmra.mrb[0].mxu0 %v338
        %v557 = vpop.f32.mrb[0].mxu0
        %v558 = vadd.f32 %v247, %v557
        %v559 = vpop.f32.mrb[0].mxu0
        %560 = vmatprep.mubr.f32.mxu0 0.0
        %561 = vmatmul.mubr.f32.gmra.mrb[0].mxu0 %v341
        %v562 = vpop.f32.mrb[0].mxu0
        %v563 = vadd.f32 %v247, %v562
        %v564 = vpop.f32.mrb[0].mxu0
        %565 = vmatprep.mubr.f32.mxu0 0.0
        %566 = vmatmul.mubr.f32.gmra.mrb[0].mxu0 %v344
        %v567 = vpop.f32.mrb[0].mxu0
        %v568 = vadd.f32 %v247, %v567
        %v569 = vpop.f32.mrb[0].mxu0
        %570 = vdwg.mxu0
        %vm571 = vcmask 31744
        %572 = vst.msk [vmem:[%s207] sm:$0xff] %vm571, %v413
        %573 = vst.msk [vmem:[%s207 + $0x8] sm:$0xff] %vm571, %v418
        %574 = vst.msk [vmem:[%s207 + $0x10] sm:$0xff] %vm571, %v423
        %575 = vst.msk [vmem:[%s207 + $0x18] sm:$0xff] %vm571, %v428
        %576 = vst.msk [vmem:[%s207 + $0x20] sm:$0xff] %vm571, %v433
        %577 = vst.msk [vmem:[%s207 + $0x28] sm:$0xff] %vm571, %v438
        %578 = vst.msk [vmem:[%s207 + $0x30] sm:$0xff] %vm571, %v443
        %579 = vst.msk [vmem:[%s207 + $0x38] sm:$0xff] %vm571, %v448
        %580 = vst.msk [vmem:[%s207 + $0x40] sm:$0xff] %vm571, %v453
        %581 = vst.msk [vmem:[%s207 + $0x48] sm:$0xff] %vm571, %v458
        %582 = vst.msk [vmem:[%s207 + $0x50] sm:$0xff] %vm571, %v463
        %583 = vst.msk [vmem:[%s207 + $0x58] sm:$0xff] %vm571, %v468
        %584 = vst.msk [vmem:[%s207 + $0x60] sm:$0xff] %vm571, %v473
        %585 = vst.msk [vmem:[%s207 + $0x68] sm:$0xff] %vm571, %v478
        %586 = vst.msk [vmem:[%s207 + $0x70] sm:$0xff] %vm571, %v483
        %587 = vst.msk [vmem:[%s207 + $0x78] sm:$0xff] %vm571, %v488
        %588 = vst.msk [vmem:[%s207 + $0x80] sm:$0xff] %vm571, %v493
        %589 = vst.msk [vmem:[%s207 + $0x88] sm:$0xff] %vm571, %v498
        %590 = vst.msk [vmem:[%s207 + $0x90] sm:$0xff] %vm571, %v503
        %591 = vst.msk [vmem:[%s207 + $0x98] sm:$0xff] %vm571, %v508
        %592 = vst.msk [vmem:[%s207 + $0xa0] sm:$0xff] %vm571, %v513
        %593 = vst.msk [vmem:[%s207 + $0xa8] sm:$0xff] %vm571, %v518
        %594 = vst.msk [vmem:[%s207 + $0xb0] sm:$0xff] %vm571, %v523
        %595 = vst.msk [vmem:[%s207 + $0xb8] sm:$0xff] %vm571, %v528
        %596 = vst.msk [vmem:[%s207 + $0xc0] sm:$0xff] %vm571, %v533
        %597 = vst.msk [vmem:[%s207 + $0xc8] sm:$0xff] %vm571, %v538
        %598 = vst.msk [vmem:[%s207 + $0xd0] sm:$0xff] %vm571, %v543
        %599 = vst.msk [vmem:[%s207 + $0xd8] sm:$0xff] %vm571, %v548
        %600 = vst.msk [vmem:[%s207 + $0xe0] sm:$0xff] %vm571, %v553
        %601 = vst.msk [vmem:[%s207 + $0xe8] sm:$0xff] %vm571, %v558
        %602 = vst.msk [vmem:[%s207 + $0xf0] sm:$0xff] %vm571, %v563
        %603 = vst.msk [vmem:[%s207 + $0xf8] sm:$0xff] %vm571, %v568
        %v604 = vsel %vm571, %v413, 0.0
        %v605 = vsel %vm571, %v418, 0.0
        %v606 = vadd.f32 %v604, %v605
        %v607 = vsel %vm571, %v423, 0.0
        %v608 = vadd.f32 %v606, %v607
        %v609 = vsel %vm571, %v428, 0.0
        %v610 = vadd.f32 %v608, %v609
        %v611 = vsel %vm571, %v433, 0.0
        %v612 = vadd.f32 %v610, %v611
        %v613 = vsel %vm571, %v438, 0.0
        %v614 = vadd.f32 %v612, %v613
        %v615 = vsel %vm571, %v443, 0.0
        %v616 = vadd.f32 %v614, %v615
        %v617 = vsel %vm571, %v448, 0.0
        %v618 = vadd.f32 %v616, %v617
        %v619 = vsel %vm571, %v453, 0.0
        %v620 = vadd.f32 %v618, %v619
        %v621 = vsel %vm571, %v458, 0.0
        %v622 = vadd.f32 %v620, %v621
        %v623 = vsel %vm571, %v463, 0.0
        %v624 = vadd.f32 %v622, %v623
        %v625 = vsel %vm571, %v468, 0.0
        %v626 = vadd.f32 %v624, %v625
        %v627 = vsel %vm571, %v473, 0.0
        %v628 = vadd.f32 %v626, %v627
        %v629 = vsel %vm571, %v478, 0.0
        %v630 = vadd.f32 %v628, %v629
        %v631 = vsel %vm571, %v483, 0.0
        %v632 = vadd.f32 %v630, %v631
        %v633 = vsel %vm571, %v488, 0.0
        %v634 = vadd.f32 %v632, %v633
        %v635 = vsel %vm571, %v493, 0.0
        %v636 = vadd.f32 %v634, %v635
        %v637 = vsel %vm571, %v498, 0.0
        %v638 = vadd.f32 %v636, %v637
        %v639 = vsel %vm571, %v503, 0.0
        %v640 = vadd.f32 %v638, %v639
        %v641 = vsel %vm571, %v508, 0.0
        %v642 = vadd.f32 %v640, %v641
        %v643 = vsel %vm571, %v513, 0.0
        %v644 = vadd.f32 %v642, %v643
        %v645 = vsel %vm571, %v518, 0.0
        %v646 = vadd.f32 %v644, %v645
        %v647 = vsel %vm571, %v523, 0.0
        %v648 = vadd.f32 %v646, %v647
        %v649 = vsel %vm571, %v528, 0.0
        %v650 = vadd.f32 %v648, %v649
        %v651 = vsel %vm571, %v533, 0.0
        %v652 = vadd.f32 %v650, %v651
        %v653 = vsel %vm571, %v538, 0.0
        %v654 = vadd.f32 %v652, %v653
        %v655 = vsel %vm571, %v543, 0.0
        %v656 = vadd.f32 %v654, %v655
        %v657 = vsel %vm571, %v548, 0.0
        %v658 = vadd.f32 %v656, %v657
        %v659 = vsel %vm571, %v553, 0.0
        %v660 = vadd.f32 %v658, %v659
        %v661 = vsel %vm571, %v558, 0.0
        %v662 = vadd.f32 %v660, %v661
        %v663 = vsel %vm571, %v563, 0.0
        %v664 = vadd.f32 %v662, %v663
        %v665 = vsel %vm571, %v568, 0.0
        %v666 = vadd.f32 %v664, %v665
        %v667 = vrot.slane %v666, 4
        %v668 = vadd.f32 %v666, %v667
        %v669 = vrot.slane %v668, 2
        %v670 = vadd.f32 %v668, %v669
        %v671 = vrot.slane %v670, 1
        %v672 = vadd.f32 %v670, %v671
        %v673 = vrcp.pop 256.0
        %v674 = vmul.f32 %v672, %v673
        %vm675 = vcmask 24576
        %676 = vst.msk [vmem:[%s197] sm:$0x1] %vm675, %v674
        %p677 = scmp.lt.s32.totalorder %s19, 1
        %s678 = scalar_select %p677, %s19, 1
        %s679 = smul.addr %s678, 32
        %s680 = smul.addr %s679, 8
        %s681 = scalar_lea.vmem %s3, %s680
        %s682 = sand.u32 %s121, 1
        %s683 = scalar_lea.sflag [#allocation3], %s682
        %s684 = sand.u32 %s121, 1
        %s685 = scalar_lea.vmem [#allocation2], %s684
        // Predicated region
        $region33: #{tpu_custom_call.1} parent=31 // pred_check
          %p686 = pneg %p105
        $region34: #{tpu_custom_call.1} parent=31 // pred_check_branch
          %688 = sbr.rel (%p686) target = $region36
        $region35: #{tpu_custom_call.1} parent=31 // pred_region
          _
        $region36: #{tpu_custom_call.1} parent=31 // pred_fallthru
          _
        // Predicated region
        $region37: #{tpu_custom_call.1} parent=31 // pred_check
          %p689 = pneg %p131
        $region38: #{tpu_custom_call.1} parent=31 // pred_check_branch
          %691 = sbr.rel (%p689) target = $region40
        $region39: #{tpu_custom_call.1} parent=31 // pred_region
          %s693 = ssub.s32 16, 16
          %694 = vsyncadd %s683, %s693
          %s695 = smul.addr %s19, 16
          %s696 = scalar_lea.hbm %s4, %s695
          %s698 = sshll.u32 %s685, 4
          %s699 = int_to_ptr.vmem [resolvable:$true] %s698
          %701 = dma.vmem_to_hbm [thread:$0]  %s699, 16, %s696, %s683
        $region40: #{tpu_custom_call.1} parent=31 // pred_fallthru
          _
      $region32: #{tpu_custom_call.1} parent=5 // pred_fallthru
        _
      %p702 = scmp.le.s32.totalorder 2, %s14
      // Predicated region
      $region41: #{tpu_custom_call.1} parent=5 // pred_check
        %p703 = pneg %p702
      $region42: #{tpu_custom_call.1} parent=5 // pred_check_branch
        %705 = sbr.rel (%p703) target = $region44
      $region43: #{tpu_custom_call.1} parent=5 // pred_region
        %s706 = ssub.s32 %s14, 2
        // Predicated region
        $region45: #{tpu_custom_call.1} parent=43 // pred_check
          %p707 = pneg %p111
        $region46: #{tpu_custom_call.1} parent=43 // pred_check_branch
          %709 = sbr.rel (%p707) target = $region48
        $region47: #{tpu_custom_call.1} parent=43 // pred_region
          %p710 = scmp.lt.s32.totalorder %s20, 1
          %s711 = scalar_select %p710, %s20, 1
          %s712 = smul.addr %s711, 32
          %s713 = smul.addr %s712, 8
          %s714 = scalar_lea.vmem %s3, %s713
        $region48: #{tpu_custom_call.1} parent=43 // pred_fallthru
          _
        // Predicated region
        $region49: #{tpu_custom_call.1} parent=43 // pred_check
          %p715 = pneg %p137
        $region50: #{tpu_custom_call.1} parent=43 // pred_check_branch
          %717 = sbr.rel (%p715) target = $region52
        $region51: #{tpu_custom_call.1} parent=43 // pred_region
          %s718 = sand.u32 %s122, 1
          %s719 = scalar_lea.sflag [#allocation3], %s718
          %s720 = sand.u32 %s122, 1
          %s721 = scalar_lea.vmem [#allocation2], %s720
          %722 = dma.done %s719, 16
        $region52: #{tpu_custom_call.1} parent=43 // pred_fallthru
          _
      $region44: #{tpu_custom_call.1} parent=5 // pred_fallthru
        _
    $region6: #{tpu_custom_call.1} parent=1 // loop_footer
      %s18 = sadd.s32 1, %s14
    $region7: #{tpu_custom_call.1} parent=1 // loop_footer_branch
      %13 = sbr.rel target = $region3
    $region8: #{tpu_custom_call.1} parent=1 // loop_exit
      _
    %723 = vsyncpa [#allocation3], 1
    %s724 = scalar_lea.sflag [#allocation3], 1
    %725 = vsyncpa %s724, 1

</llo_original>
